<compile_context>
chip_gen: v5e
topology: v5e:2x2
jax: 0.10.0
libtpu: 0.0.40
codegen_flags: <defaults>
</compile_context>

<pallas_src>
import jax
import jax.numpy as jnp
from jax.experimental import pallas as pl
from jax.experimental.pallas import tpu as pltpu
from functools import reduce
from operator import __add__


def _same_padding_amounts(kernel_size):
    # Mirrors: reduce(__add__, [(k//2 + (k - 2*(k//2)) - 1, k//2) for k in kernel_size[::-1]])
    conv_padding = reduce(
        __add__, [(k // 2 + (k - 2 * (k // 2)) - 1, k // 2) for k in kernel_size[::-1]]
    )
    pad_left, pad_right, pad_top, pad_bottom = conv_padding
    return pad_left, pad_right, pad_top, pad_bottom


def _padded_plane_bytes(h, w, itemsize):
    """VMEM footprint of one (h, w) plane after (sublane, lane) layout tiling."""
    sublane = max(8, 32 // itemsize)          # 8 for f32, 16 for bf16, 32 for int8
    h_t = -(-h // sublane) * sublane
    w_t = -(-w // 128) * 128
    return h_t * w_t * itemsize


def _make_pad_kernel(pad_top, pad_bottom, pad_left, pad_right, dtype):
    def pad_kernel(x_ref, o_ref):
        # x_ref: (m_block, H, W)   o_ref: (m_block, Hp, Wp)
        tile = x_ref[...]
        mb, H, W = tile.shape
        Wp = W + pad_left + pad_right
        # Compose the padded tile in registers (XLU shifts / VPU selects are free
        # filler in this DMA-bound kernel), then issue ONE aligned full-block store.
        if pad_left or pad_right:
            parts = []
            if pad_left:
                parts.append(jnp.zeros((mb, H, pad_left), dtype))
            parts.append(tile)
            if pad_right:
                parts.append(jnp.zeros((mb, H, pad_right), dtype))
            tile = jnp.concatenate(parts, axis=2)
        if pad_top or pad_bottom:
            parts = []
            if pad_top:
                parts.append(jnp.zeros((mb, pad_top, Wp), dtype))
            parts.append(tile)
            if pad_bottom:
                parts.append(jnp.zeros((mb, pad_bottom, Wp), dtype))
            tile = jnp.concatenate(parts, axis=1)
        o_ref[...] = tile

    return pad_kernel


def same_padding(x, kernel_size):
    """Zero-pad NCHW input exactly as SamePadding(kernel_size) (nn.ZeroPad2d) would."""
    N, C, H, W = x.shape
    pad_left, pad_right, pad_top, pad_bottom = _same_padding_amounts(kernel_size)
    Hp = H + pad_top + pad_bottom
    Wp = W + pad_left + pad_right
    if (pad_left | pad_right | pad_top | pad_bottom) == 0:
        return x

    itemsize = jnp.dtype(x.dtype).itemsize
    M = N * C

    # Generation-aware VMEM budgeting (v5e/v6e: 128 MiB, v7x: 64 MiB per TC).
    try:
        vmem_capacity = int(pltpu.get_tpu_info().vmem_capacity_bytes)
    except Exception:
        vmem_capacity = 64 * 1024 * 1024   # conservative fallback: v7x per-core size
    vmem_budget = vmem_capacity // 4       # double-buffered in+out block footprint
    vmem_limit = vmem_capacity // 2

    # Double-buffered in + out footprint per fused-(N*C) row (padded tile sizes).
    per_m_bytes = 2 * (_padded_plane_bytes(H, W, itemsize)
                       + _padded_plane_bytes(Hp, Wp, itemsize))

    if per_m_bytes > vmem_budget:
        # TODO(synk): add an H-row-tiled Pallas path for planes too large for VMEM;
        # until then fall back to XLA's (memory-bound) pad instead of failing to compile.
        return jnp.pad(x, ((0, 0), (0, 0), (pad_top, pad_bottom), (pad_left, pad_right)))

    m_block_max = min(M, max(1, vmem_budget // per_m_bytes))
    n_chunks = -(-M // m_block_max)
    # Ensure v7x's two TensorCores both get work when the workload is non-trivial.
    total_bytes = M * (H * W + Hp * Wp) * itemsize
    if n_chunks == 1 and M >= 2 and total_bytes >= (2 << 20):
        n_chunks = 2
    m_block = -(-M // n_chunks)
    grid_m = -(-M // m_block)       # non-divisible tail handled by Pallas block clipping

    x3 = x.reshape(M, H, W)         # free reshape for contiguous NCHW
    kernel = _make_pad_kernel(pad_top, pad_bottom, pad_left, pad_right, x.dtype)

    out3 = pl.pallas_call(
        kernel,
        out_shape=jax.ShapeDtypeStruct((M, Hp, Wp), x.dtype),
        grid_spec=pltpu.PrefetchScalarGridSpec(
            num_scalar_prefetch=0,
            grid=(grid_m,),
            in_specs=[pl.BlockSpec((m_block, H, W), lambda m: (m, 0, 0))],
            out_specs=pl.BlockSpec((m_block, Hp, Wp), lambda m: (m, 0, 0)),
        ),
        compiler_params=pltpu.CompilerParams(
            dimension_semantics=("parallel",),
            vmem_limit_bytes=vmem_limit,
        ),
    )(x3)
    return out3.reshape(N, C, Hp, Wp)


if __name__ == "__main__":
    # Deterministic example input, NCHW: batch=2, channels=4, H=16, W=16
    key = jax.random.PRNGKey(0)
    x = jax.random.normal(key, (2, 4, 16, 16), dtype=jnp.float32)

    # One odd and one even kernel dim to exercise asymmetric padding.
    kernel_size = (3, 4)

    out = same_padding(x, kernel_size)
    out = jax.block_until_ready(out)

    # Reference check against jnp.pad (same semantics as nn.ZeroPad2d)
    pl_, pr_, pt_, pb_ = _same_padding_amounts(kernel_size)
    ref = jnp.pad(x, ((0, 0), (0, 0), (pt_, pb_), (pl_, pr_)))
    assert out.shape == ref.shape, (out.shape, ref.shape)
    assert jnp.array_equal(out, ref), "mismatch vs reference zero padding"

    print("KERNEL_OK")
</pallas_src>

<mosaic_0001>
module attributes {stable_mosaic.version = 11 : i64} {
  func.func @pad_kernel(%arg0: i32, %arg1: memref<8x16x16xf32, #tpu.memory_space<vmem>>, %arg2: memref<8x18x19xf32, #tpu.memory_space<vmem>>) attributes {dimension_semantics = [#tpu.dimension_semantics<parallel>], iteration_bounds = array<i64: 1>, scalar_prefetch = 0 : i64, scratch_operands = 0 : i64, tpu.core_type = #tpu.core_type<tc>, window_params = [{transform_indices = @transform_0, window_bounds = array<i64: 8, 16, 16>}, {transform_indices = @transform_1, window_bounds = array<i64: 8, 18, 19>}]} {
    %c0 = arith.constant 0 : index
    %c0_0 = arith.constant 0 : index
    %c0_1 = arith.constant 0 : index
    %0 = vector.load %arg1[%c0, %c0_0, %c0_1] : memref<8x16x16xf32, #tpu.memory_space<vmem>>, vector<8x16x16xf32>
    %cst = arith.constant 0.000000e+00 : f32
    %1 = vector.broadcast %cst : f32 to vector<8x16x1xf32>
    %cst_2 = arith.constant 0.000000e+00 : f32
    %2 = vector.broadcast %cst_2 : f32 to vector<8x16x2xf32>
    %3 = tpu.concatenate %1, %0, %2 in 2 : vector<8x16x1xf32>, vector<8x16x16xf32>, vector<8x16x2xf32> -> vector<8x16x19xf32>
    %cst_3 = arith.constant 0.000000e+00 : f32
    %4 = vector.broadcast %cst_3 : f32 to vector<8x1x19xf32>
    %cst_4 = arith.constant 0.000000e+00 : f32
    %5 = vector.broadcast %cst_4 : f32 to vector<8x1x19xf32>
    %6 = tpu.concatenate %4, %3, %5 in 1 : vector<8x1x19xf32>, vector<8x16x19xf32>, vector<8x1x19xf32> -> vector<8x18x19xf32>
    %c0_5 = arith.constant 0 : index
    %c0_6 = arith.constant 0 : index
    %c0_7 = arith.constant 0 : index
    %7 = vector.load %arg2[%c0_5, %c0_6, %c0_7] : memref<8x18x19xf32, #tpu.memory_space<vmem>>, vector<8x18x19xf32>
    tpu.vector_store %arg2[%c0_5, %c0_6, %c0_7], %6 {strides = array<i32>} : memref<8x18x19xf32, #tpu.memory_space<vmem>>, vector<8x18x19xf32>,
    return
  }
  func.func @transform_0(%arg0: i32) -> (i32, i32, i32) {
    %c0_i32 = arith.constant 0 : i32
    %c0_i32_0 = arith.constant 0 : i32
    %c0_i32_1 = arith.constant 0 : i32
    return %arg0, %c0_i32, %c0_i32_0 : i32, i32, i32
  }
  func.func @transform_1(%arg0: i32) -> (i32, i32, i32) {
    %c0_i32 = arith.constant 0 : i32
    %c0_i32_0 = arith.constant 0 : i32
    %c0_i32_1 = arith.constant 0 : i32
    return %arg0, %c0_i32, %c0_i32_0 : i32, i32, i32
  }
}

</mosaic_0001>

<llo_original>
// kernel: tpu_custom_call.1
$region0: #{tpu_custom_call.1}
  #allocation0 [shape = 'u32[]', space=smem, size = 0x4, offset = 0x4, fixed_abs, tag = 'smem constant byte address 0x4 - core index']
  #allocation1 [shape = 'u32[72,128]{1,0:T(1,128)}', space=vmem, size = 0x9000, scoped, tag = 'internal scratch']
  %s0 = inlined_call_operand.hbm [shape: f32[8,16,16], index: 0, kind: input, shape index: {}]
  %s1 = inlined_call_operand.vmem [shape: f32[8,18,19], index: 1, kind: output, shape index: {}]
  %s2 = sld [smem:[#allocation0]]
  $region18: #{tpu_custom_call.1} parent=0
    _
  %s4 = ssub.s32 1, %s2
  %s5 = scalar_select 0, %s4, %s2
  $region1: #{tpu_custom_call.1} parent=0
    #allocation2 [shape = 'u8[65536]{0}', space=vmem, size = 0x10000, scoped, tag = 'input window, operand 0, single buffered']
    #allocation3 [shape = 's32[1]{0}', space=sflag, size = 0x4, scoped, tag = 'scoped memory for tpu_custom_call.1']
    %6 = vsyncpa [#allocation3], 0
    // Predicated region
    $region2: #{tpu_custom_call.1} parent=1 // pred_check
      _
    $region3: #{tpu_custom_call.1} parent=1 // pred_check_branch
      %8 = sbr.rel (0) target = $region5
    $region4: #{tpu_custom_call.1} parent=1 // pred_region
      %10 = vsyncadd [#allocation3], 0
      %s11 = sshll.u32 %s0, 4
      %s12 = int_to_ptr.hbm [resolvable:$true] %s11
      %s13 = sshll.u32 [#allocation2], 4
      %s14 = int_to_ptr.vmem [resolvable:$true] %s13
      %19 = dma.hbm_to_vmem [thread:$0]  %s12, 2048, %s14, [#allocation3], 128, 128, 8
    $region5: #{tpu_custom_call.1} parent=1 // pred_fallthru
      _
    // Predicated region
    $region6: #{tpu_custom_call.1} parent=1 // pred_check
      _
    $region7: #{tpu_custom_call.1} parent=1 // pred_check_branch
      %21 = sbr.rel (0) target = $region9
    $region8: #{tpu_custom_call.1} parent=1 // pred_region
      %23 = dma.done [#allocation3], 2048
    $region9: #{tpu_custom_call.1} parent=1 // pred_fallthru
      _
    %v24 = vld [vmem:[#allocation2] sm:$0xff]
    %v25 = vld [vmem:[#allocation2 + $0x8] sm:$0xff]
    %v26 = vld [vmem:[#allocation2 + $0x10] sm:$0xff]
    %v27 = vld [vmem:[#allocation2 + $0x18] sm:$0xff]
    %v28 = vld [vmem:[#allocation2 + $0x20] sm:$0xff]
    %v29 = vld [vmem:[#allocation2 + $0x28] sm:$0xff]
    %v30 = vld [vmem:[#allocation2 + $0x30] sm:$0xff]
    %v31 = vld [vmem:[#allocation2 + $0x38] sm:$0xff]
    %v32 = vld [vmem:[#allocation2 + $0x40] sm:$0xff]
    %v33 = vld [vmem:[#allocation2 + $0x48] sm:$0xff]
    %v34 = vld [vmem:[#allocation2 + $0x50] sm:$0xff]
    %v35 = vld [vmem:[#allocation2 + $0x58] sm:$0xff]
    %v36 = vld [vmem:[#allocation2 + $0x60] sm:$0xff]
    %v37 = vld [vmem:[#allocation2 + $0x68] sm:$0xff]
    %v38 = vld [vmem:[#allocation2 + $0x70] sm:$0xff]
    %v39 = vld [vmem:[#allocation2 + $0x78] sm:$0xff]
    %56 = vrot.lane.b32.xlu0 %v24, 1
    %v57 = vpop.permute.xlu0 %56
    %58 = vrot.lane.b32.xlu0 %v25, 1
    %v59 = vpop.permute.xlu0 %58
    %60 = vrot.lane.b32.xlu0 %v26, 1
    %v61 = vpop.permute.xlu0 %60
    %62 = vrot.lane.b32.xlu0 %v27, 1
    %v63 = vpop.permute.xlu0 %62
    %64 = vrot.lane.b32.xlu0 %v28, 1
    %v65 = vpop.permute.xlu0 %64
    %66 = vrot.lane.b32.xlu0 %v29, 1
    %v67 = vpop.permute.xlu0 %66
    %68 = vrot.lane.b32.xlu0 %v30, 1
    %v69 = vpop.permute.xlu0 %68
    %70 = vrot.lane.b32.xlu0 %v31, 1
    %v71 = vpop.permute.xlu0 %70
    %72 = vrot.lane.b32.xlu0 %v32, 1
    %v73 = vpop.permute.xlu0 %72
    %74 = vrot.lane.b32.xlu0 %v33, 1
    %v75 = vpop.permute.xlu0 %74
    %76 = vrot.lane.b32.xlu0 %v34, 1
    %v77 = vpop.permute.xlu0 %76
    %78 = vrot.lane.b32.xlu0 %v35, 1
    %v79 = vpop.permute.xlu0 %78
    %80 = vrot.lane.b32.xlu0 %v36, 1
    %v81 = vpop.permute.xlu0 %80
    %82 = vrot.lane.b32.xlu0 %v37, 1
    %v83 = vpop.permute.xlu0 %82
    %84 = vrot.lane.b32.xlu0 %v38, 1
    %v85 = vpop.permute.xlu0 %84
    %86 = vrot.lane.b32.xlu0 %v39, 1
    %v87 = vpop.permute.xlu0 %86
    %vm104 = vcmask 7168
    %v105 = vsel %vm104, 0.0, %v57
    %v106 = vsel %vm104, 0.0, %v59
    %v107 = vsel %vm104, 0.0, %v61
    %v108 = vsel %vm104, 0.0, %v63
    %v109 = vsel %vm104, 0.0, %v65
    %v110 = vsel %vm104, 0.0, %v67
    %v111 = vsel %vm104, 0.0, %v69
    %v112 = vsel %vm104, 0.0, %v71
    %v113 = vsel %vm104, 0.0, %v73
    %v114 = vsel %vm104, 0.0, %v75
    %v115 = vsel %vm104, 0.0, %v77
    %v116 = vsel %vm104, 0.0, %v79
    %v117 = vsel %vm104, 0.0, %v81
    %v118 = vsel %vm104, 0.0, %v83
    %v119 = vsel %vm104, 0.0, %v85
    %v120 = vsel %vm104, 0.0, %v87
    %vm121 = vcmask 138240
    %v122 = vsel %vm121, %v105, 0.0
    %v123 = vsel %vm121, %v106, 0.0
    %v124 = vsel %vm121, %v107, 0.0
    %v125 = vsel %vm121, %v108, 0.0
    %v126 = vsel %vm121, %v109, 0.0
    %v127 = vsel %vm121, %v110, 0.0
    %v128 = vsel %vm121, %v111, 0.0
    %v129 = vsel %vm121, %v112, 0.0
    %v130 = vsel %vm121, %v113, 0.0
    %v131 = vsel %vm121, %v114, 0.0
    %v132 = vsel %vm121, %v115, 0.0
    %v133 = vsel %vm121, %v116, 0.0
    %v134 = vsel %vm121, %v117, 0.0
    %v135 = vsel %vm121, %v118, 0.0
    %v136 = vsel %vm121, %v119, 0.0
    %v137 = vsel %vm121, %v120, 0.0
    %vm154 = vcmask 1040384
    %v155 = vrot.slane %v122, 7
    %v156 = vrot.slane %v123, 7
    %v157 = vsel %vm154, %v155, %v156
    %v158 = vrot.slane %v124, 7
    %v159 = vrot.slane %v125, 7
    %v160 = vsel %vm154, %v158, %v159
    %v161 = vrot.slane %v126, 7
    %v162 = vrot.slane %v127, 7
    %v163 = vsel %vm154, %v161, %v162
    %v164 = vrot.slane %v128, 7
    %v165 = vrot.slane %v129, 7
    %v166 = vsel %vm154, %v164, %v165
    %v167 = vrot.slane %v130, 7
    %v168 = vrot.slane %v131, 7
    %v169 = vsel %vm154, %v167, %v168
    %v170 = vrot.slane %v132, 7
    %v171 = vrot.slane %v133, 7
    %v172 = vsel %vm154, %v170, %v171
    %v173 = vrot.slane %v134, 7
    %v174 = vrot.slane %v135, 7
    %v175 = vsel %vm154, %v173, %v174
    %v176 = vrot.slane %v136, 7
    %v177 = vrot.slane %v137, 7
    %v178 = vsel %vm154, %v176, %v177
    %v203 = vsel %vm154, 0.0, %v155
    %v204 = vsel %vm154, 0.0, %v158
    %v205 = vsel %vm154, 0.0, %v161
    %v206 = vsel %vm154, 0.0, %v164
    %v207 = vsel %vm154, 0.0, %v167
    %v208 = vsel %vm154, 0.0, %v170
    %v209 = vsel %vm154, 0.0, %v173
    %v210 = vsel %vm154, 0.0, %v176
    %v211 = vsel %vm154, %v156, 0.0
    %v212 = vsel %vm154, %v159, 0.0
    %v213 = vsel %vm154, %v162, 0.0
    %v214 = vsel %vm154, %v165, 0.0
    %v215 = vsel %vm154, %v168, 0.0
    %v216 = vsel %vm154, %v171, 0.0
    %v217 = vsel %vm154, %v174, 0.0
    %v218 = vsel %vm154, %v177, 0.0
    %vm219 = vcmask 154624
    %220 = vst.msk [vmem:[%s1] sm:$0xff] %vm219, %v203
    %221 = vst.msk [vmem:[%s1 + $0x8] sm:$0xff] %vm219, %v157
    %vm222 = vcmask 148480
    %223 = vst.msk [vmem:[%s1 + $0x10] sm:$0x3] %vm222, %v211
    %224 = vst.msk [vmem:[%s1 + $0x18] sm:$0xff] %vm219, %v204
    %225 = vst.msk [vmem:[%s1 + $0x20] sm:$0xff] %vm219, %v160
    %226 = vst.msk [vmem:[%s1 + $0x28] sm:$0x3] %vm222, %v212
    %227 = vst.msk [vmem:[%s1 + $0x30] sm:$0xff] %vm219, %v205
    %228 = vst.msk [vmem:[%s1 + $0x38] sm:$0xff] %vm219, %v163
    %229 = vst.msk [vmem:[%s1 + $0x40] sm:$0x3] %vm222, %v213
    %230 = vst.msk [vmem:[%s1 + $0x48] sm:$0xff] %vm219, %v206
    %231 = vst.msk [vmem:[%s1 + $0x50] sm:$0xff] %vm219, %v166
    %232 = vst.msk [vmem:[%s1 + $0x58] sm:$0x3] %vm222, %v214
    %233 = vst.msk [vmem:[%s1 + $0x60] sm:$0xff] %vm219, %v207
    %234 = vst.msk [vmem:[%s1 + $0x68] sm:$0xff] %vm219, %v169
    %235 = vst.msk [vmem:[%s1 + $0x70] sm:$0x3] %vm222, %v215
    %236 = vst.msk [vmem:[%s1 + $0x78] sm:$0xff] %vm219, %v208
    %237 = vst.msk [vmem:[%s1 + $0x80] sm:$0xff] %vm219, %v172
    %238 = vst.msk [vmem:[%s1 + $0x88] sm:$0x3] %vm222, %v216
    %239 = vst.msk [vmem:[%s1 + $0x90] sm:$0xff] %vm219, %v209
    %240 = vst.msk [vmem:[%s1 + $0x98] sm:$0xff] %vm219, %v175
    %241 = vst.msk [vmem:[%s1 + $0xa0] sm:$0x3] %vm222, %v217
    %242 = vst.msk [vmem:[%s1 + $0xa8] sm:$0xff] %vm219, %v210
    %243 = vst.msk [vmem:[%s1 + $0xb0] sm:$0xff] %vm219, %v178
    %244 = vst.msk [vmem:[%s1 + $0xb8] sm:$0x3] %vm222, %v218
    // Predicated region
    $region10: #{tpu_custom_call.1} parent=1 // pred_check
      _
    $region11: #{tpu_custom_call.1} parent=1 // pred_check_branch
      %246 = sbr.rel (0) target = $region13
    $region12: #{tpu_custom_call.1} parent=1 // pred_region
      _
    $region13: #{tpu_custom_call.1} parent=1 // pred_fallthru
      _
    // Predicated region
    $region14: #{tpu_custom_call.1} parent=1 // pred_check
      _
    $region15: #{tpu_custom_call.1} parent=1 // pred_check_branch
      %248 = sbr.rel (0) target = $region17
    $region16: #{tpu_custom_call.1} parent=1 // pred_region
      _
    $region17: #{tpu_custom_call.1} parent=1 // pred_fallthru
      _
    %249 = vsyncpa [#allocation3], 1

</llo_original>
